<compile_context>
chip_gen: v6e
topology: v6e:2x2x1
jax: 0.10.0
libtpu: 0.0.40
codegen_flags: <defaults>
</compile_context>

<pallas_src>
import jax
import jax.numpy as jnp
from jax.experimental import pallas as pl
from jax.experimental.pallas import tpu as pltpu


def _pos_add_kernel(x_ref, pos_ref, o_ref):
    # x_ref:   (Bt, S*H) block of batch rows (lane-dense last dim)
    # pos_ref: (1,  S*H) positional embedding, broadcast over the Bt rows
    # o_ref:   (Bt, S*H) output block
    o_ref[...] = x_ref[...] + pos_ref[...]


def _choose_batch_tile(B, row_bytes):
    """Pick how many batch rows to process per grid step.

    Working set per step (x + out, double-buffered, plus the pos row):
        4 * Bt * row_bytes + 2 * row_bytes
    kept under a 12 MiB budget (fits v5e's 16 MiB default scoped VMEM and is
    comfortably below v6e/v7x scoped defaults).  Capped at 8 rows.
    """
    budget = 12 * 1024 * 1024
    bt = (budget - 2 * row_bytes) // (4 * row_bytes)
    bt = int(max(1, min(8, bt)))
    if bt >= B:
        return B  # whole batch in one step; block dim == array dim is always legal
    return bt


def add_positional_embedding(x, pos_embed):
    """x: (B, S, H), pos_embed: (1, S, H) -> (B, S, H) = x + pos_embed."""
    B, S, H = x.shape
    assert pos_embed.shape == (1, S, H)

    # Keep the kernel in the activation dtype (bf16 stays bf16).
    pos_embed = pos_embed.astype(x.dtype)

    # Lane-dense layout: collapse (S, H) into one last dim.
    N = S * H
    x2 = x.reshape(B, N)
    pos2 = pos_embed.reshape(1, N)

    itemsize = jnp.dtype(x.dtype).itemsize
    bt = _choose_batch_tile(B, N * itemsize)
    grid = (pl.cdiv(B, bt),)

    cost = pl.CostEstimate(
        flops=B * N,
        transcendentals=0,
        bytes_accessed=(2 * B * N + N) * itemsize,
    )

    out2 = pl.pallas_call(
        _pos_add_kernel,
        out_shape=jax.ShapeDtypeStruct((B, N), x.dtype),
        grid_spec=pltpu.PrefetchScalarGridSpec(
            num_scalar_prefetch=0,
            grid=grid,
            in_specs=[
                # bt batch rows per grid step, full lane-dense row each.
                pl.BlockSpec((bt, N), lambda b: (b, 0)),
                # positional embedding: same (only) block at every step.
                pl.BlockSpec((1, N), lambda b: (0, 0)),
            ],
            out_specs=pl.BlockSpec((bt, N), lambda b: (b, 0)),
        ),
        compiler_params=pltpu.CompilerParams(
            dimension_semantics=("parallel",),
        ),
        cost_estimate=cost,
    )(x2, pos2)

    return out2.reshape(B, S, H)


class PositionalEmbeddingPallas:
    """JAX/Pallas analogue of the PyTorch PositionalEmbedding module
    (learned positional embedding subclass semantics)."""

    def __init__(self, config, key):
        self.config = config
        self.hidden_size = config["hidden_size"]
        self.image_size = config["image_size"]
        self.patch_size = config["patch_size"]
        self.num_patches = (self.image_size // self.patch_size) ** 2
        self.initializer_range = config.get("initializer_range", 0.02)
        # learned positional embedding: (1, num_patches + 1, hidden_size)
        self.pos_embed = (
            jax.random.normal(
                key, (1, self.num_patches + 1, self.hidden_size), dtype=jnp.float32
            )
            * self.initializer_range
        )

    def __call__(self, x):
        # x: (B, seq_len = num_patches + 1, hidden_size)
        return add_positional_embedding(x, self.pos_embed)


if __name__ == "__main__":
    # Small config consistent with the module:
    #   image_size=16, patch_size=4 -> num_patches=16, seq_len=17, hidden=32
    config = {
        "hidden_size": 32,
        "image_size": 16,
        "patch_size": 4,
        "initializer_range": 0.02,
    }

    key = jax.random.PRNGKey(0)
    k_param, k_x1, k_x2 = jax.random.split(key, 3)

    module = PositionalEmbeddingPallas(config, k_param)

    S = module.num_patches + 1  # 17 (includes CLS token)
    H = module.hidden_size      # 32

    # Case 1: demo shape (B=2) -- whole batch in one grid step.
    B1 = 2
    x1 = jax.random.normal(k_x1, (B1, S, H), dtype=jnp.float32)
    out1 = jax.block_until_ready(module(x1))
    ref1 = x1 + module.pos_embed
    assert out1.shape == (B1, S, H)
    assert jnp.allclose(out1, ref1, atol=1e-6), "mismatch vs reference (B=2)"

    # Case 2: larger batch to exercise batch-tiling (Bt=8, grid=2).
    B2 = 16
    x2 = jax.random.normal(k_x2, (B2, S, H), dtype=jnp.float32)
    out2 = jax.block_until_ready(module(x2))
    ref2 = x2 + module.pos_embed
    assert out2.shape == (B2, S, H)
    assert jnp.allclose(out2, ref2, atol=1e-6), "mismatch vs reference (B=16)"

    print("KERNEL_OK")
</pallas_src>

<mosaic_0001>
module attributes {stable_mosaic.version = 11 : i64} {
  func.func @_pos_add_kernel(%arg0: i32, %arg1: memref<2x544xf32, #tpu.memory_space<vmem>>, %arg2: memref<1x544xf32, #tpu.memory_space<vmem>>, %arg3: memref<2x544xf32, #tpu.memory_space<vmem>>) attributes {dimension_semantics = [#tpu.dimension_semantics<parallel>], iteration_bounds = array<i64: 1>, scalar_prefetch = 0 : i64, scratch_operands = 0 : i64, tpu.core_type = #tpu.core_type<tc>, window_params = [{transform_indices = @transform_0, window_bounds = array<i64: 2, 544>}, {pipeline_mode = #tpu.pipeline_mode<synchronous>, transform_indices = @transform_1, window_bounds = array<i64: 1, 544>}, {transform_indices = @transform_2, window_bounds = array<i64: 2, 544>}]} {
    %c0 = arith.constant 0 : index
    %c0_0 = arith.constant 0 : index
    %0 = vector.load %arg1[%c0, %c0_0] : memref<2x544xf32, #tpu.memory_space<vmem>>, vector<2x544xf32>
    %c0_1 = arith.constant 0 : index
    %c0_2 = arith.constant 0 : index
    %1 = vector.load %arg2[%c0_1, %c0_2] : memref<1x544xf32, #tpu.memory_space<vmem>>, vector<1x544xf32>
    %2 = vector.broadcast %1 : vector<1x544xf32> to vector<2x544xf32>
    %3 = arith.addf %0, %2 : vector<2x544xf32>
    %c0_3 = arith.constant 0 : index
    %c0_4 = arith.constant 0 : index
    %4 = vector.load %arg3[%c0_3, %c0_4] : memref<2x544xf32, #tpu.memory_space<vmem>>, vector<2x544xf32>
    tpu.vector_store %arg3[%c0_3, %c0_4], %3 {strides = array<i32>} : memref<2x544xf32, #tpu.memory_space<vmem>>, vector<2x544xf32>,
    return
  }
  func.func @transform_0(%arg0: i32) -> (i32, i32) {
    %c0_i32 = arith.constant 0 : i32
    %c0_i32_0 = arith.constant 0 : i32
    return %arg0, %c0_i32 : i32, i32
  }
  func.func @transform_1(%arg0: i32) -> (i32, i32) {
    %c0_i32 = arith.constant 0 : i32
    %c0_i32_0 = arith.constant 0 : i32
    %c0_i32_1 = arith.constant 0 : i32
    return %c0_i32, %c0_i32_0 : i32, i32
  }
  func.func @transform_2(%arg0: i32) -> (i32, i32) {
    %c0_i32 = arith.constant 0 : i32
    %c0_i32_0 = arith.constant 0 : i32
    return %arg0, %c0_i32 : i32, i32
  }
}

</mosaic_0001>

<llo_original>
// kernel: tpu_custom_call.1
$region0: #{tpu_custom_call.1}
  #allocation0 [shape = 'u32[]', space=smem, size = 0x4, offset = 0x4, fixed_abs, tag = 'smem constant byte address 0x4 - core index']
  #allocation1 [shape = 'u32[144,128]{1,0:T(1,128)}', space=vmem, size = 0x12000, scoped, tag = 'internal scratch']
  %s0 = inlined_call_operand.hbm [shape: f32[2,544], index: 0, kind: input, shape index: {}]
  %s1 = inlined_call_operand.hbm [shape: f32[1,544], index: 1, kind: input, shape index: {}]
  %s2 = inlined_call_operand.hbm [shape: f32[2,544], index: 2, kind: output, shape index: {}]
  %s3 = sld [smem:[#allocation0]]
  $region26: #{tpu_custom_call.1} parent=0
    _
  %s5 = ssub.s32 1, %s3
  %s6 = scalar_select 0, %s5, %s3
  $region1: #{tpu_custom_call.1} parent=0
    #allocation2 [shape = 'u8[5120]{0}', space=vmem, size = 0x1400, scoped, tag = 'input window, operand 0, single buffered']
    #allocation3 [shape = 's32[1]{0}', space=sflag, size = 0x4, scoped, tag = 'scoped memory for tpu_custom_call.1']
    #allocation4 [shape = 's32[1]{0}', space=sflag, size = 0x4, scoped, tag = 'scoped memory for tpu_custom_call.1']
    #allocation5 [shape = 'u8[2560]{0}', space=vmem, size = 0xc00, scoped, tag = 'input window, operand 1, single buffered']
    #allocation6 [shape = 's32[1]{0}', space=sflag, size = 0x4, scoped, tag = 'scoped memory for tpu_custom_call.1']
    #allocation7 [shape = 'u8[5120]{0}', space=vmem, size = 0x1400, scoped, tag = 'output window, operand 0, single buffered']
    %7 = vsyncpa [#allocation3], 0
    %8 = vsyncpa [#allocation6], 0
    %9 = vsyncpa [#allocation4], 0
    // Predicated region
    $region2: #{tpu_custom_call.1} parent=1 // pred_check
      _
    $region3: #{tpu_custom_call.1} parent=1 // pred_check_branch
      %11 = sbr.rel (0) target = $region5
    $region4: #{tpu_custom_call.1} parent=1 // pred_region
      %s13 = ssub.s32 160, 160
      %14 = vsyncadd [#allocation3], %s13
      %s16 = sshll.u32 [#allocation2], 4
      %s17 = int_to_ptr.vmem [resolvable:$true] %s16
      %19 = dma.hbm_to_vmem [thread:$0]  %s0, 160, %s17, [#allocation3]
    $region5: #{tpu_custom_call.1} parent=1 // pred_fallthru
      _
    // Predicated region
    $region6: #{tpu_custom_call.1} parent=1 // pred_check
      _
    $region7: #{tpu_custom_call.1} parent=1 // pred_check_branch
      %21 = sbr.rel (0) target = $region9
    $region8: #{tpu_custom_call.1} parent=1 // pred_region
      %s23 = ssub.s32 80, 80
      %24 = vsyncadd [#allocation6], %s23
      %s26 = sshll.u32 [#allocation5], 4
      %s27 = int_to_ptr.vmem [resolvable:$true] %s26
      %29 = dma.hbm_to_vmem [thread:$0]  %s1, 80, %s27, [#allocation6]
    $region9: #{tpu_custom_call.1} parent=1 // pred_fallthru
      _
    // Predicated region
    $region10: #{tpu_custom_call.1} parent=1 // pred_check
      _
    $region11: #{tpu_custom_call.1} parent=1 // pred_check_branch
      %31 = sbr.rel (0) target = $region13
    $region12: #{tpu_custom_call.1} parent=1 // pred_region
      %32 = dma.done [#allocation3], 160
    $region13: #{tpu_custom_call.1} parent=1 // pred_fallthru
      _
    // Predicated region
    $region14: #{tpu_custom_call.1} parent=1 // pred_check
      _
    $region15: #{tpu_custom_call.1} parent=1 // pred_check_branch
      %34 = sbr.rel (0) target = $region17
    $region16: #{tpu_custom_call.1} parent=1 // pred_region
      %35 = dma.done [#allocation6], 80
    $region17: #{tpu_custom_call.1} parent=1 // pred_fallthru
      _
    %v36 = vld [vmem:[#allocation2] sm:$0xff]
    %v37 = vld [vmem:[#allocation2 + $0x8] sm:$0x3]
    %v38 = vld [vmem:[#allocation5] sm:$0x1f]
    %v40 = vlaneseq
    %v41 = vshrl.u32 %v40, 7
    %v42 = vsub.s32 0, %v41
    %v43 = vrot.slane %v38, %v42
    %v44 = vlaneseq
    %v45 = vshrl.u32 %v44, 7
    %v46 = vsub.s32 1, %v45
    %v47 = vrot.slane %v38, %v46
    %v48 = vlaneseq
    %v49 = vshrl.u32 %v48, 7
    %v50 = vsub.s32 2, %v49
    %v51 = vrot.slane %v38, %v50
    %v52 = vlaneseq
    %v53 = vshrl.u32 %v52, 7
    %v54 = vsub.s32 3, %v53
    %v55 = vrot.slane %v38, %v54
    %v56 = vlaneseq
    %v57 = vshrl.u32 %v56, 7
    %v58 = vsub.s32 4, %v57
    %v59 = vrot.slane %v38, %v58
    %v60 = vcombine.low %v43, %v47
    %v61 = vcombine.low %v51, %v55
    %v63 = vunpack.c.l.s4 1983009808
    %v64 = vunpack.c.0.s8 %v63
    %v65 = vlaneseq
    %v66 = vshrl.u32 %v65, 7
    %v67 = vsub.s32 %v64, %v66
    %v68 = vrot.slane %v60, %v67
    %v70 = vunpack.c.l.s4 1983009808
    %v71 = vunpack.c.0.s8 %v70
    %v72 = vlaneseq
    %v73 = vshrl.u32 %v72, 7
    %v74 = vsub.s32 %v71, %v73
    %v75 = vrot.slane %v61, %v74
    %v76 = vcombine.low %v68, %v75
    %v78 = vunpack.c.l.s4 1983009808
    %v79 = vunpack.c.0.s8 %v78
    %v80 = vlaneseq
    %v81 = vshrl.u32 %v80, 7
    %v82 = vsub.s32 %v79, %v81
    %v83 = vrot.slane %v59, %v82
    %v86 = vadd.f32 %v36, %v76
    %v87 = vadd.f32 %v37, %v83
    %88 = vst [vmem:[#allocation7] sm:$0xff] %v86
    %vm89 = vcmask 254976
    %90 = vst.msk [vmem:[#allocation7 + $0x8] sm:$0x3] %vm89, %v87
    // Predicated region
    $region18: #{tpu_custom_call.1} parent=1 // pred_check
      _
    $region19: #{tpu_custom_call.1} parent=1 // pred_check_branch
      %92 = sbr.rel (0) target = $region21
    $region20: #{tpu_custom_call.1} parent=1 // pred_region
      %s94 = ssub.s32 160, 160
      %95 = vsyncadd [#allocation4], %s94
      %s97 = sshll.u32 [#allocation7], 4
      %s98 = int_to_ptr.vmem [resolvable:$true] %s97
      %100 = dma.vmem_to_hbm [thread:$0]  %s98, 160, %s2, [#allocation4]
    $region21: #{tpu_custom_call.1} parent=1 // pred_fallthru
      _
    // Predicated region
    $region22: #{tpu_custom_call.1} parent=1 // pred_check
      _
    $region23: #{tpu_custom_call.1} parent=1 // pred_check_branch
      %102 = sbr.rel (0) target = $region25
    $region24: #{tpu_custom_call.1} parent=1 // pred_region
      %103 = dma.done [#allocation4], 160
    $region25: #{tpu_custom_call.1} parent=1 // pred_fallthru
      _
    %104 = vsyncpa [#allocation3], 1
    %105 = vsyncpa [#allocation6], 1
    %106 = vsyncpa [#allocation4], 1

</llo_original>
